<compile_context>
chip_gen: v5e
topology: v5e:2x2
jax: 0.10.0
libtpu: 0.0.40
codegen_flags: <defaults>
</compile_context>

<pallas_src>
import jax
import jax.numpy as jnp
from jax.experimental import pallas as pl
from jax.experimental.pallas import tpu as pltpu


def attention_gru_kernel(facts_ref, g_ref,
                         wfact_ref, bfact_ref,
                         wc_ref, bu_ref,
                         c_ref, pre_ref):
    """facts_ref: (B*S, E) batch-major (row = b*S + s), g_ref: (B, S),
    wfact_ref: (E, 2H) = [Wr^T | W^T], bfact_ref: (1, 2H) = [br+bur | bw],
    wc_ref: (H, 2H) = [Ur^T | U^T], bu_ref: (1, H).
    Output c_ref: (B, H).  pre_ref: (B*S, 2H) VMEM scratch."""
    B, H = c_ref.shape
    S = g_ref.shape[1]

    # ---- Hoisted precompute: ALL fact-dependent work in one MXU matmul ----
    # ---- with the constant biases folded in (off the serial chain).    ----
    pre_ref[...] = (
        jnp.dot(facts_ref[...], wfact_ref[...],
                preferred_element_type=jnp.float32)
        + bfact_ref[...])

    g_all = g_ref[...]   # (B, S): one load; static lane slices per step below
    wc = wc_ref[...]     # (H, 2H) fused Ur|U
    bu = bu_ref[...]     # (1, H)

    def sigmoid1(x):
        # sigmoid(x) == 0.5 * tanh(0.5 * x) + 0.5 : single EUP round-trip.
        return 0.5 * jnp.tanh(0.5 * x) + 0.5

    C = jnp.zeros((B, H), jnp.float32)
    for sid in range(S):   # fully static unroll (S is tiny)
        # (B, 2H) slab for this step: rows {b*S + sid}, static-start strided
        # ref read -- no host-side transpose copy needed.
        pre_s = pre_ref[pl.ds(sid, B, stride=S), :]
        # Single fused C-dependent matmul on the serial critical path.
        cu = jnp.dot(C, wc, preferred_element_type=jnp.float32)   # (B, 2H)
        # r = sigmoid(Wr(fact) + br + Ur(C) + bur)
        r = sigmoid1(pre_s[:, :H] + cu[:, :H])
        # h_tilda = tanh(W(fact) + bw + r * (U(C) + bu))
        h_tilda = jnp.tanh(pre_s[:, H:] + r * (cu[:, H:] + bu))
        # h = g * h_tilda + (1 - g) * C  ==  C + g * (h_tilda - C)
        g = g_all[:, sid:sid + 1]                                  # (B, 1)
        C = C + g * (h_tilda - C)

    c_ref[...] = C


def prepare_params(params):
    """One-time fusion of the module's Linear weights (x @ W^T + b form).
    Call at param-init / checkpoint-load time, NOT per forward: every
    concat/transpose/cast here is a separate XLA op + HBM round-trip."""
    H = params["Wr_w"].shape[0]
    return {
        "w_fact": jnp.concatenate(
            [params["Wr_w"].T, params["W_w"].T], axis=1).astype(jnp.float32),   # (E, 2H)
        "b_fact": jnp.concatenate(
            [params["Wr_b"] + params["Ur_b"], params["W_b"]]
        ).reshape(1, 2 * H).astype(jnp.float32),                                 # (1, 2H)
        "w_c": jnp.concatenate(
            [params["Ur_w"].T, params["U_w"].T], axis=1).astype(jnp.float32),    # (H, 2H)
        "b_u": params["U_b"].reshape(1, H).astype(jnp.float32),                  # (1, H)
    }


@jax.jit
def attention_gru(facts, G, fused):
    """facts: (B, S, E) f32, G: (B, S) f32, fused = prepare_params(params)
    -> C: (B, H) f32."""
    B, S, E = facts.shape
    H = fused["b_u"].shape[1]
    assert E == fused["w_fact"].shape[0]
    assert E == H, "module requires input_size == hidden_size (C.expand_as(fact))"
    assert G.shape == (B, S)

    facts_bs = facts.reshape(B * S, E).astype(jnp.float32)   # free row-major reshape
    g = G.astype(jnp.float32)                                 # no-op when already f32

    operands = (facts_bs, g, fused["w_fact"], fused["b_fact"],
                fused["w_c"], fused["b_u"])
    vmem_spec = pl.BlockSpec(memory_space=pltpu.MemorySpace.VMEM)

    return pl.pallas_call(
        attention_gru_kernel,
        out_shape=jax.ShapeDtypeStruct((B, H), jnp.float32),
        in_specs=[vmem_spec] * len(operands),
        out_specs=vmem_spec,
        scratch_shapes=[pltpu.VMEM((B * S, 2 * H), jnp.float32)],
    )(*operands)


def attention_gru_ref(facts, G, params):
    """Pure-JAX reference reproducing the PyTorch forward."""
    B, S, E = facts.shape
    H = params["Wr_w"].shape[0]
    C = jnp.zeros((B, H), jnp.float32)
    for sid in range(S):
        fact = facts[:, sid, :]
        g = G[:, sid][:, None]
        r = jax.nn.sigmoid(fact @ params["Wr_w"].T + params["Wr_b"]
                           + C @ params["Ur_w"].T + params["Ur_b"])
        h_tilda = jnp.tanh(fact @ params["W_w"].T + params["W_b"]
                           + r * (C @ params["U_w"].T + params["U_b"]))
        C = g * h_tilda + (1.0 - g) * C
    return C


def init_params(key, input_size, hidden_size):
    """Deterministic init: xavier-normal weights (as in the module), small biases."""
    ks = jax.random.split(key, 8)

    def xavier(k, shape):
        fan_out, fan_in = shape
        std = (2.0 / (fan_in + fan_out)) ** 0.5
        return std * jax.random.normal(k, shape, jnp.float32)

    def bias(k, n):
        bound = 1.0 / (n ** 0.5)
        return jax.random.uniform(k, (n,), jnp.float32, -bound, bound)

    return {
        "Wr_w": xavier(ks[0], (hidden_size, input_size)),
        "Wr_b": bias(ks[1], hidden_size),
        "Ur_w": xavier(ks[2], (hidden_size, hidden_size)),
        "Ur_b": bias(ks[3], hidden_size),
        "W_w":  xavier(ks[4], (hidden_size, input_size)),
        "W_b":  bias(ks[5], hidden_size),
        "U_w":  xavier(ks[6], (hidden_size, hidden_size)),
        "U_b":  bias(ks[7], hidden_size),
    }


if __name__ == "__main__":
    # input_size == hidden_size (required by the module: C.expand_as(fact))
    B, S, H = 2, 8, 32
    key = jax.random.PRNGKey(0)
    k_facts, k_g, k_params = jax.random.split(key, 3)

    facts = jax.random.normal(k_facts, (B, S, H), jnp.float32)
    G = jax.nn.softmax(jax.random.normal(k_g, (B, S), jnp.float32), axis=-1)
    params = init_params(k_params, H, H)
    fused = prepare_params(params)          # once, at "init" time (not per call)

    out = jax.block_until_ready(attention_gru(facts, G, fused))
    ref = attention_gru_ref(facts, G, params)

    assert out.shape == (B, H)
    assert jnp.allclose(out, ref, atol=1e-5, rtol=1e-5), "mismatch vs reference"
    print("KERNEL_OK")
</pallas_src>

<mosaic_0001>
module attributes {stable_mosaic.version = 11 : i64} {
  func.func @attention_gru_kernel(%arg0: memref<16x32xf32, #tpu.memory_space<vmem>>, %arg1: memref<2x8xf32, #tpu.memory_space<vmem>>, %arg2: memref<32x64xf32, #tpu.memory_space<vmem>>, %arg3: memref<1x64xf32, #tpu.memory_space<vmem>>, %arg4: memref<32x64xf32, #tpu.memory_space<vmem>>, %arg5: memref<1x32xf32, #tpu.memory_space<vmem>>, %arg6: memref<2x32xf32, #tpu.memory_space<vmem>>, %arg7: memref<16x64xf32, #tpu.memory_space<vmem>>) attributes {dimension_semantics = [], scalar_prefetch = 0 : i64, scratch_operands = 1 : i64, tpu.core_type = #tpu.core_type<tc>} {
    %c0 = arith.constant 0 : index
    %c0_0 = arith.constant 0 : index
    %0 = vector.load %arg0[%c0, %c0_0] : memref<16x32xf32, #tpu.memory_space<vmem>>, vector<16x32xf32>
    %c0_1 = arith.constant 0 : index
    %c0_2 = arith.constant 0 : index
    %1 = vector.load %arg2[%c0_1, %c0_2] : memref<32x64xf32, #tpu.memory_space<vmem>>, vector<32x64xf32>
    %cst = arith.constant dense<0.000000e+00> : vector<16x64xf32>
    %2 = tpu.matmul %0, %1, %cst {dimension_numbers = #tpu.dot_dimension_numbers<[1], [0], [0], [1], [0, 0, 1, 1], [], []>} : vector<16x32xf32>, vector<32x64xf32>, vector<16x64xf32> -> vector<16x64xf32>
    %c0_3 = arith.constant 0 : index
    %c0_4 = arith.constant 0 : index
    %3 = vector.load %arg3[%c0_3, %c0_4] : memref<1x64xf32, #tpu.memory_space<vmem>>, vector<1x64xf32>
    %4 = vector.broadcast %3 : vector<1x64xf32> to vector<16x64xf32>
    %5 = arith.addf %2, %4 : vector<16x64xf32>
    %c0_5 = arith.constant 0 : index
    %c0_6 = arith.constant 0 : index
    %6 = vector.load %arg7[%c0_5, %c0_6] : memref<16x64xf32, #tpu.memory_space<vmem>>, vector<16x64xf32>
    tpu.vector_store %arg7[%c0_5, %c0_6], %5 {strides = array<i32>} : memref<16x64xf32, #tpu.memory_space<vmem>>, vector<16x64xf32>,
    %c0_7 = arith.constant 0 : index
    %c0_8 = arith.constant 0 : index
    %7 = vector.load %arg1[%c0_7, %c0_8] : memref<2x8xf32, #tpu.memory_space<vmem>>, vector<2x8xf32>
    %c0_9 = arith.constant 0 : index
    %c0_10 = arith.constant 0 : index
    %8 = vector.load %arg4[%c0_9, %c0_10] : memref<32x64xf32, #tpu.memory_space<vmem>>, vector<32x64xf32>
    %c0_11 = arith.constant 0 : index
    %c0_12 = arith.constant 0 : index
    %9 = vector.load %arg5[%c0_11, %c0_12] : memref<1x32xf32, #tpu.memory_space<vmem>>, vector<1x32xf32>
    %cst_13 = arith.constant 0.000000e+00 : f32
    %10 = vector.broadcast %cst_13 : f32 to vector<2x32xf32>
    %c0_14 = arith.constant 0 : index
    %c0_15 = arith.constant 0 : index
    %11 = tpu.strided_load %arg7[%c0_14, %c0_15] {strides = array<i32: 8, 1>} : memref<16x64xf32, #tpu.memory_space<vmem>>, vector<2x64xf32>
    %cst_16 = arith.constant dense<0.000000e+00> : vector<2x64xf32>
    %12 = tpu.matmul %10, %8, %cst_16 {dimension_numbers = #tpu.dot_dimension_numbers<[1], [0], [0], [1], [0, 0, 1, 1], [], []>} : vector<2x32xf32>, vector<32x64xf32>, vector<2x64xf32> -> vector<2x64xf32>
    %13 = vector.extract_strided_slice %11 {offsets = [0, 0], sizes = [2, 32], strides = [1, 1]} : vector<2x64xf32> to vector<2x32xf32>
    %14 = vector.extract_strided_slice %12 {offsets = [0, 0], sizes = [2, 32], strides = [1, 1]} : vector<2x64xf32> to vector<2x32xf32>
    %15 = arith.addf %13, %14 : vector<2x32xf32>
    %cst_17 = arith.constant 5.000000e-01 : f32
    %16 = vector.broadcast %cst_17 : f32 to vector<2x32xf32>
    %17 = arith.mulf %16, %15 : vector<2x32xf32>
    %18 = math.tanh %17 : vector<2x32xf32>
    %cst_18 = arith.constant 5.000000e-01 : f32
    %19 = vector.broadcast %cst_18 : f32 to vector<2x32xf32>
    %20 = arith.mulf %19, %18 : vector<2x32xf32>
    %cst_19 = arith.constant 5.000000e-01 : f32
    %21 = vector.broadcast %cst_19 : f32 to vector<2x32xf32>
    %22 = arith.addf %20, %21 : vector<2x32xf32>
    %23 = vector.extract_strided_slice %11 {offsets = [0, 32], sizes = [2, 32], strides = [1, 1]} : vector<2x64xf32> to vector<2x32xf32>
    %24 = vector.extract_strided_slice %12 {offsets = [0, 32], sizes = [2, 32], strides = [1, 1]} : vector<2x64xf32> to vector<2x32xf32>
    %25 = vector.broadcast %9 : vector<1x32xf32> to vector<2x32xf32>
    %26 = arith.addf %24, %25 : vector<2x32xf32>
    %27 = arith.mulf %22, %26 : vector<2x32xf32>
    %28 = arith.addf %23, %27 : vector<2x32xf32>
    %29 = math.tanh %28 : vector<2x32xf32>
    %30 = vector.extract_strided_slice %7 {offsets = [0, 0], sizes = [2, 1], strides = [1, 1]} : vector<2x8xf32> to vector<2x1xf32>
    %31 = arith.subf %29, %10 : vector<2x32xf32>
    %32 = vector.broadcast %30 : vector<2x1xf32> to vector<2x32xf32>
    %33 = arith.mulf %32, %31 : vector<2x32xf32>
    %34 = arith.addf %10, %33 : vector<2x32xf32>
    %c1 = arith.constant 1 : index
    %c0_20 = arith.constant 0 : index
    %35 = tpu.strided_load %arg7[%c1, %c0_20] {strides = array<i32: 8, 1>} : memref<16x64xf32, #tpu.memory_space<vmem>>, vector<2x64xf32>
    %cst_21 = arith.constant dense<0.000000e+00> : vector<2x64xf32>
    %36 = tpu.matmul %34, %8, %cst_21 {dimension_numbers = #tpu.dot_dimension_numbers<[1], [0], [0], [1], [0, 0, 1, 1], [], []>} : vector<2x32xf32>, vector<32x64xf32>, vector<2x64xf32> -> vector<2x64xf32>
    %37 = vector.extract_strided_slice %35 {offsets = [0, 0], sizes = [2, 32], strides = [1, 1]} : vector<2x64xf32> to vector<2x32xf32>
    %38 = vector.extract_strided_slice %36 {offsets = [0, 0], sizes = [2, 32], strides = [1, 1]} : vector<2x64xf32> to vector<2x32xf32>
    %39 = arith.addf %37, %38 : vector<2x32xf32>
    %cst_22 = arith.constant 5.000000e-01 : f32
    %40 = vector.broadcast %cst_22 : f32 to vector<2x32xf32>
    %41 = arith.mulf %40, %39 : vector<2x32xf32>
    %42 = math.tanh %41 : vector<2x32xf32>
    %cst_23 = arith.constant 5.000000e-01 : f32
    %43 = vector.broadcast %cst_23 : f32 to vector<2x32xf32>
    %44 = arith.mulf %43, %42 : vector<2x32xf32>
    %cst_24 = arith.constant 5.000000e-01 : f32
    %45 = vector.broadcast %cst_24 : f32 to vector<2x32xf32>
    %46 = arith.addf %44, %45 : vector<2x32xf32>
    %47 = vector.extract_strided_slice %35 {offsets = [0, 32], sizes = [2, 32], strides = [1, 1]} : vector<2x64xf32> to vector<2x32xf32>
    %48 = vector.extract_strided_slice %36 {offsets = [0, 32], sizes = [2, 32], strides = [1, 1]} : vector<2x64xf32> to vector<2x32xf32>
    %49 = vector.broadcast %9 : vector<1x32xf32> to vector<2x32xf32>
    %50 = arith.addf %48, %49 : vector<2x32xf32>
    %51 = arith.mulf %46, %50 : vector<2x32xf32>
    %52 = arith.addf %47, %51 : vector<2x32xf32>
    %53 = math.tanh %52 : vector<2x32xf32>
    %54 = vector.extract_strided_slice %7 {offsets = [0, 1], sizes = [2, 1], strides = [1, 1]} : vector<2x8xf32> to vector<2x1xf32>
    %55 = arith.subf %53, %34 : vector<2x32xf32>
    %56 = vector.broadcast %54 : vector<2x1xf32> to vector<2x32xf32>
    %57 = arith.mulf %56, %55 : vector<2x32xf32>
    %58 = arith.addf %34, %57 : vector<2x32xf32>
    %c2 = arith.constant 2 : index
    %c0_25 = arith.constant 0 : index
    %59 = tpu.strided_load %arg7[%c2, %c0_25] {strides = array<i32: 8, 1>} : memref<16x64xf32, #tpu.memory_space<vmem>>, vector<2x64xf32>
    %cst_26 = arith.constant dense<0.000000e+00> : vector<2x64xf32>
    %60 = tpu.matmul %58, %8, %cst_26 {dimension_numbers = #tpu.dot_dimension_numbers<[1], [0], [0], [1], [0, 0, 1, 1], [], []>} : vector<2x32xf32>, vector<32x64xf32>, vector<2x64xf32> -> vector<2x64xf32>
    %61 = vector.extract_strided_slice %59 {offsets = [0, 0], sizes = [2, 32], strides = [1, 1]} : vector<2x64xf32> to vector<2x32xf32>
    %62 = vector.extract_strided_slice %60 {offsets = [0, 0], sizes = [2, 32], strides = [1, 1]} : vector<2x64xf32> to vector<2x32xf32>
    %63 = arith.addf %61, %62 : vector<2x32xf32>
    %cst_27 = arith.constant 5.000000e-01 : f32
    %64 = vector.broadcast %cst_27 : f32 to vector<2x32xf32>
    %65 = arith.mulf %64, %63 : vector<2x32xf32>
    %66 = math.tanh %65 : vector<2x32xf32>
    %cst_28 = arith.constant 5.000000e-01 : f32
    %67 = vector.broadcast %cst_28 : f32 to vector<2x32xf32>
    %68 = arith.mulf %67, %66 : vector<2x32xf32>
    %cst_29 = arith.constant 5.000000e-01 : f32
    %69 = vector.broadcast %cst_29 : f32 to vector<2x32xf32>
    %70 = arith.addf %68, %69 : vector<2x32xf32>
    %71 = vector.extract_strided_slice %59 {offsets = [0, 32], sizes = [2, 32], strides = [1, 1]} : vector<2x64xf32> to vector<2x32xf32>
    %72 = vector.extract_strided_slice %60 {offsets = [0, 32], sizes = [2, 32], strides = [1, 1]} : vector<2x64xf32> to vector<2x32xf32>
    %73 = vector.broadcast %9 : vector<1x32xf32> to vector<2x32xf32>
    %74 = arith.addf %72, %73 : vector<2x32xf32>
    %75 = arith.mulf %70, %74 : vector<2x32xf32>
    %76 = arith.addf %71, %75 : vector<2x32xf32>
    %77 = math.tanh %76 : vector<2x32xf32>
    %78 = vector.extract_strided_slice %7 {offsets = [0, 2], sizes = [2, 1], strides = [1, 1]} : vector<2x8xf32> to vector<2x1xf32>
    %79 = arith.subf %77, %58 : vector<2x32xf32>
    %80 = vector.broadcast %78 : vector<2x1xf32> to vector<2x32xf32>
    %81 = arith.mulf %80, %79 : vector<2x32xf32>
    %82 = arith.addf %58, %81 : vector<2x32xf32>
    %c3 = arith.constant 3 : index
    %c0_30 = arith.constant 0 : index
    %83 = tpu.strided_load %arg7[%c3, %c0_30] {strides = array<i32: 8, 1>} : memref<16x64xf32, #tpu.memory_space<vmem>>, vector<2x64xf32>
    %cst_31 = arith.constant dense<0.000000e+00> : vector<2x64xf32>
    %84 = tpu.matmul %82, %8, %cst_31 {dimension_numbers = #tpu.dot_dimension_numbers<[1], [0], [0], [1], [0, 0, 1, 1], [], []>} : vector<2x32xf32>, vector<32x64xf32>, vector<2x64xf32> -> vector<2x64xf32>
    %85 = vector.extract_strided_slice %83 {offsets = [0, 0], sizes = [2, 32], strides = [1, 1]} : vector<2x64xf32> to vector<2x32xf32>
    %86 = vector.extract_strided_slice %84 {offsets = [0, 0], sizes = [2, 32], strides = [1, 1]} : vector<2x64xf32> to vector<2x32xf32>
    %87 = arith.addf %85, %86 : vector<2x32xf32>
    %cst_32 = arith.constant 5.000000e-01 : f32
    %88 = vector.broadcast %cst_32 : f32 to vector<2x32xf32>
    %89 = arith.mulf %88, %87 : vector<2x32xf32>
    %90 = math.tanh %89 : vector<2x32xf32>
    %cst_33 = arith.constant 5.000000e-01 : f32
    %91 = vector.broadcast %cst_33 : f32 to vector<2x32xf32>
    %92 = arith.mulf %91, %90 : vector<2x32xf32>
    %cst_34 = arith.constant 5.000000e-01 : f32
    %93 = vector.broadcast %cst_34 : f32 to vector<2x32xf32>
    %94 = arith.addf %92, %93 : vector<2x32xf32>
    %95 = vector.extract_strided_slice %83 {offsets = [0, 32], sizes = [2, 32], strides = [1, 1]} : vector<2x64xf32> to vector<2x32xf32>
    %96 = vector.extract_strided_slice %84 {offsets = [0, 32], sizes = [2, 32], strides = [1, 1]} : vector<2x64xf32> to vector<2x32xf32>
    %97 = vector.broadcast %9 : vector<1x32xf32> to vector<2x32xf32>
    %98 = arith.addf %96, %97 : vector<2x32xf32>
    %99 = arith.mulf %94, %98 : vector<2x32xf32>
    %100 = arith.addf %95, %99 : vector<2x32xf32>
    %101 = math.tanh %100 : vector<2x32xf32>
    %102 = vector.extract_strided_slice %7 {offsets = [0, 3], sizes = [2, 1], strides = [1, 1]} : vector<2x8xf32> to vector<2x1xf32>
    %103 = arith.subf %101, %82 : vector<2x32xf32>
    %104 = vector.broadcast %102 : vector<2x1xf32> to vector<2x32xf32>
    %105 = arith.mulf %104, %103 : vector<2x32xf32>
    %106 = arith.addf %82, %105 : vector<2x32xf32>
    %c4 = arith.constant 4 : index
    %c0_35 = arith.constant 0 : index
    %107 = tpu.strided_load %arg7[%c4, %c0_35] {strides = array<i32: 8, 1>} : memref<16x64xf32, #tpu.memory_space<vmem>>, vector<2x64xf32>
    %cst_36 = arith.constant dense<0.000000e+00> : vector<2x64xf32>
    %108 = tpu.matmul %106, %8, %cst_36 {dimension_numbers = #tpu.dot_dimension_numbers<[1], [0], [0], [1], [0, 0, 1, 1], [], []>} : vector<2x32xf32>, vector<32x64xf32>, vector<2x64xf32> -> vector<2x64xf32>
    %109 = vector.extract_strided_slice %107 {offsets = [0, 0], sizes = [2, 32], strides = [1, 1]} : vector<2x64xf32> to vector<2x32xf32>
    %110 = vector.extract_strided_slice %108 {offsets = [0, 0], sizes = [2, 32], strides = [1, 1]} : vector<2x64xf32> to vector<2x32xf32>
    %111 = arith.addf %109, %110 : vector<2x32xf32>
    %cst_37 = arith.constant 5.000000e-01 : f32
    %112 = vector.broadcast %cst_37 : f32 to vector<2x32xf32>
    %113 = arith.mulf %112, %111 : vector<2x32xf32>
    %114 = math.tanh %113 : vector<2x32xf32>
    %cst_38 = arith.constant 5.000000e-01 : f32
    %115 = vector.broadcast %cst_38 : f32 to vector<2x32xf32>
    %116 = arith.mulf %115, %114 : vector<2x32xf32>
    %cst_39 = arith.constant 5.000000e-01 : f32
    %117 = vector.broadcast %cst_39 : f32 to vector<2x32xf32>
    %118 = arith.addf %116, %117 : vector<2x32xf32>
    %119 = vector.extract_strided_slice %107 {offsets = [0, 32], sizes = [2, 32], strides = [1, 1]} : vector<2x64xf32> to vector<2x32xf32>
    %120 = vector.extract_strided_slice %108 {offsets = [0, 32], sizes = [2, 32], strides = [1, 1]} : vector<2x64xf32> to vector<2x32xf32>
    %121 = vector.broadcast %9 : vector<1x32xf32> to vector<2x32xf32>
    %122 = arith.addf %120, %121 : vector<2x32xf32>
    %123 = arith.mulf %118, %122 : vector<2x32xf32>
    %124 = arith.addf %119, %123 : vector<2x32xf32>
    %125 = math.tanh %124 : vector<2x32xf32>
    %126 = vector.extract_strided_slice %7 {offsets = [0, 4], sizes = [2, 1], strides = [1, 1]} : vector<2x8xf32> to vector<2x1xf32>
    %127 = arith.subf %125, %106 : vector<2x32xf32>
    %128 = vector.broadcast %126 : vector<2x1xf32> to vector<2x32xf32>
    %129 = arith.mulf %128, %127 : vector<2x32xf32>
    %130 = arith.addf %106, %129 : vector<2x32xf32>
    %c5 = arith.constant 5 : index
    %c0_40 = arith.constant 0 : index
    %131 = tpu.strided_load %arg7[%c5, %c0_40] {strides = array<i32: 8, 1>} : memref<16x64xf32, #tpu.memory_space<vmem>>, vector<2x64xf32>
    %cst_41 = arith.constant dense<0.000000e+00> : vector<2x64xf32>
    %132 = tpu.matmul %130, %8, %cst_41 {dimension_numbers = #tpu.dot_dimension_numbers<[1], [0], [0], [1], [0, 0, 1, 1], [], []>} : vector<2x32xf32>, vector<32x64xf32>, vector<2x64xf32> -> vector<2x64xf32>
    %133 = vector.extract_strided_slice %131 {offsets = [0, 0], sizes = [2, 32], strides = [1, 1]} : vector<2x64xf32> to vector<2x32xf32>
    %134 = vector.extract_strided_slice %132 {offsets = [0, 0], sizes = [2, 32], strides = [1, 1]} : vector<2x64xf32> to vector<2x32xf32>
    %135 = arith.addf %133, %134 : vector<2x32xf32>
    %cst_42 = arith.constant 5.000000e-01 : f32
    %136 = vector.broadcast %cst_42 : f32 to vector<2x32xf32>
    %137 = arith.mulf %136, %135 : vector<2x32xf32>
    %138 = math.tanh %137 : vector<2x32xf32>
    %cst_43 = arith.constant 5.000000e-01 : f32
    %139 = vector.broadcast %cst_43 : f32 to vector<2x32xf32>
    %140 = arith.mulf %139, %138 : vector<2x32xf32>
    %cst_44 = arith.constant 5.000000e-01 : f32
    %141 = vector.broadcast %cst_44 : f32 to vector<2x32xf32>
    %142 = arith.addf %140, %141 : vector<2x32xf32>
    %143 = vector.extract_strided_slice %131 {offsets = [0, 32], sizes = [2, 32], strides = [1, 1]} : vector<2x64xf32> to vector<2x32xf32>
    %144 = vector.extract_strided_slice %132 {offsets = [0, 32], sizes = [2, 32], strides = [1, 1]} : vector<2x64xf32> to vector<2x32xf32>
    %145 = vector.broadcast %9 : vector<1x32xf32> to vector<2x32xf32>
    %146 = arith.addf %144, %145 : vector<2x32xf32>
    %147 = arith.mulf %142, %146 : vector<2x32xf32>
    %148 = arith.addf %143, %147 : vector<2x32xf32>
    %149 = math.tanh %148 : vector<2x32xf32>
    %150 = vector.extract_strided_slice %7 {offsets = [0, 5], sizes = [2, 1], strides = [1, 1]} : vector<2x8xf32> to vector<2x1xf32>
    %151 = arith.subf %149, %130 : vector<2x32xf32>
    %152 = vector.broadcast %150 : vector<2x1xf32> to vector<2x32xf32>
    %153 = arith.mulf %152, %151 : vector<2x32xf32>
    %154 = arith.addf %130, %153 : vector<2x32xf32>
    %c6 = arith.constant 6 : index
    %c0_45 = arith.constant 0 : index
    %155 = tpu.strided_load %arg7[%c6, %c0_45] {strides = array<i32: 8, 1>} : memref<16x64xf32, #tpu.memory_space<vmem>>, vector<2x64xf32>
    %cst_46 = arith.constant dense<0.000000e+00> : vector<2x64xf32>
    %156 = tpu.matmul %154, %8, %cst_46 {dimension_numbers = #tpu.dot_dimension_numbers<[1], [0], [0], [1], [0, 0, 1, 1], [], []>} : vector<2x32xf32>, vector<32x64xf32>, vector<2x64xf32> -> vector<2x64xf32>
    %157 = vector.extract_strided_slice %155 {offsets = [0, 0], sizes = [2, 32], strides = [1, 1]} : vector<2x64xf32> to vector<2x32xf32>
    %158 = vector.extract_strided_slice %156 {offsets = [0, 0], sizes = [2, 32], strides = [1, 1]} : vector<2x64xf32> to vector<2x32xf32>
    %159 = arith.addf %157, %158 : vector<2x32xf32>
    %cst_47 = arith.constant 5.000000e-01 : f32
    %160 = vector.broadcast %cst_47 : f32 to vector<2x32xf32>
    %161 = arith.mulf %160, %159 : vector<2x32xf32>
    %162 = math.tanh %161 : vector<2x32xf32>
    %cst_48 = arith.constant 5.000000e-01 : f32
    %163 = vector.broadcast %cst_48 : f32 to vector<2x32xf32>
    %164 = arith.mulf %163, %162 : vector<2x32xf32>
    %cst_49 = arith.constant 5.000000e-01 : f32
    %165 = vector.broadcast %cst_49 : f32 to vector<2x32xf32>
    %166 = arith.addf %164, %165 : vector<2x32xf32>
    %167 = vector.extract_strided_slice %155 {offsets = [0, 32], sizes = [2, 32], strides = [1, 1]} : vector<2x64xf32> to vector<2x32xf32>
    %168 = vector.extract_strided_slice %156 {offsets = [0, 32], sizes = [2, 32], strides = [1, 1]} : vector<2x64xf32> to vector<2x32xf32>
    %169 = vector.broadcast %9 : vector<1x32xf32> to vector<2x32xf32>
    %170 = arith.addf %168, %169 : vector<2x32xf32>
    %171 = arith.mulf %166, %170 : vector<2x32xf32>
    %172 = arith.addf %167, %171 : vector<2x32xf32>
    %173 = math.tanh %172 : vector<2x32xf32>
    %174 = vector.extract_strided_slice %7 {offsets = [0, 6], sizes = [2, 1], strides = [1, 1]} : vector<2x8xf32> to vector<2x1xf32>
    %175 = arith.subf %173, %154 : vector<2x32xf32>
    %176 = vector.broadcast %174 : vector<2x1xf32> to vector<2x32xf32>
    %177 = arith.mulf %176, %175 : vector<2x32xf32>
    %178 = arith.addf %154, %177 : vector<2x32xf32>
    %c7 = arith.constant 7 : index
    %c0_50 = arith.constant 0 : index
    %179 = tpu.strided_load %arg7[%c7, %c0_50] {strides = array<i32: 8, 1>} : memref<16x64xf32, #tpu.memory_space<vmem>>, vector<2x64xf32>
    %cst_51 = arith.constant dense<0.000000e+00> : vector<2x64xf32>
    %180 = tpu.matmul %178, %8, %cst_51 {dimension_numbers = #tpu.dot_dimension_numbers<[1], [0], [0], [1], [0, 0, 1, 1], [], []>} : vector<2x32xf32>, vector<32x64xf32>, vector<2x64xf32> -> vector<2x64xf32>
    %181 = vector.extract_strided_slice %179 {offsets = [0, 0], sizes = [2, 32], strides = [1, 1]} : vector<2x64xf32> to vector<2x32xf32>
    %182 = vector.extract_strided_slice %180 {offsets = [0, 0], sizes = [2, 32], strides = [1, 1]} : vector<2x64xf32> to vector<2x32xf32>
    %183 = arith.addf %181, %182 : vector<2x32xf32>
    %cst_52 = arith.constant 5.000000e-01 : f32
    %184 = vector.broadcast %cst_52 : f32 to vector<2x32xf32>
    %185 = arith.mulf %184, %183 : vector<2x32xf32>
    %186 = math.tanh %185 : vector<2x32xf32>
    %cst_53 = arith.constant 5.000000e-01 : f32
    %187 = vector.broadcast %cst_53 : f32 to vector<2x32xf32>
    %188 = arith.mulf %187, %186 : vector<2x32xf32>
    %cst_54 = arith.constant 5.000000e-01 : f32
    %189 = vector.broadcast %cst_54 : f32 to vector<2x32xf32>
    %190 = arith.addf %188, %189 : vector<2x32xf32>
    %191 = vector.extract_strided_slice %179 {offsets = [0, 32], sizes = [2, 32], strides = [1, 1]} : vector<2x64xf32> to vector<2x32xf32>
    %192 = vector.extract_strided_slice %180 {offsets = [0, 32], sizes = [2, 32], strides = [1, 1]} : vector<2x64xf32> to vector<2x32xf32>
    %193 = vector.broadcast %9 : vector<1x32xf32> to vector<2x32xf32>
    %194 = arith.addf %192, %193 : vector<2x32xf32>
    %195 = arith.mulf %190, %194 : vector<2x32xf32>
    %196 = arith.addf %191, %195 : vector<2x32xf32>
    %197 = math.tanh %196 : vector<2x32xf32>
    %198 = vector.extract_strided_slice %7 {offsets = [0, 7], sizes = [2, 1], strides = [1, 1]} : vector<2x8xf32> to vector<2x1xf32>
    %199 = arith.subf %197, %178 : vector<2x32xf32>
    %200 = vector.broadcast %198 : vector<2x1xf32> to vector<2x32xf32>
    %201 = arith.mulf %200, %199 : vector<2x32xf32>
    %202 = arith.addf %178, %201 : vector<2x32xf32>
    %c0_55 = arith.constant 0 : index
    %c0_56 = arith.constant 0 : index
    %203 = vector.load %arg6[%c0_55, %c0_56] : memref<2x32xf32, #tpu.memory_space<vmem>>, vector<2x32xf32>
    tpu.vector_store %arg6[%c0_55, %c0_56], %202 {strides = array<i32>} : memref<2x32xf32, #tpu.memory_space<vmem>>, vector<2x32xf32>,
    return
  }
}

</mosaic_0001>

<llo_original>
// kernel: attention_gru.1
$region0: #{attention_gru.1}
  #allocation0 [shape = 'u32[]', space=smem, size = 0x4, offset = 0x4, fixed_abs, tag = 'smem constant byte address 0x4 - core index']
  #allocation1 [shape = 'u32[72,128]{1,0:T(1,128)}', space=vmem, size = 0x9000, scoped, tag = 'internal scratch']
  #allocation2 [shape = 'f32[16,64]{1,0:T(8,128)}', space=vmem, size = 0x2000, scoped, tag = 'scratch operand']
  %s0 = inlined_call_operand.hbm [shape: f32[16,32], index: 0, kind: input, shape index: {}]
  %s1 = inlined_call_operand.hbm [shape: f32[2,8], index: 1, kind: input, shape index: {}]
  %s2 = inlined_call_operand.hbm [shape: f32[32,64], index: 2, kind: input, shape index: {}]
  %s3 = inlined_call_operand.vmem [shape: f32[1,64], index: 3, kind: input, shape index: {}]
  %s4 = inlined_call_operand.hbm [shape: f32[32,64], index: 4, kind: input, shape index: {}]
  %s5 = inlined_call_operand.vmem [shape: f32[1,32], index: 5, kind: input, shape index: {}]
  %s6 = inlined_call_operand.hbm [shape: f32[2,32], index: 6, kind: output, shape index: {}]
  %s7 = sld [smem:[#allocation0]]
  $region50: #{attention_gru.1} parent=0
    _
  %s9 = ssub.s32 1, %s7
  %s10 = scalar_select 0, %s9, %s7
  $region1: #{attention_gru.1} parent=0
    #allocation3 [shape = 'u8[8192]{0}', space=vmem, size = 0x2000, scoped, tag = 'input window, operand 0, single buffered']
    #allocation4 [shape = 's32[1]{0}', space=sflag, size = 0x4, scoped, tag = 'scoped memory for attention_gru.1']
    #allocation5 [shape = 's32[1]{0}', space=sflag, size = 0x4, scoped, tag = 'scoped memory for attention_gru.1']
    #allocation6 [shape = 'u8[1024]{0}', space=vmem, size = 0x400, scoped, tag = 'input window, operand 1, single buffered']
    #allocation7 [shape = 's32[1]{0}', space=sflag, size = 0x4, scoped, tag = 'scoped memory for attention_gru.1']
    #allocation8 [shape = 'u8[16384]{0}', space=vmem, size = 0x4000, scoped, tag = 'input window, operand 2, single buffered']
    #allocation9 [shape = 'u8[16384]{0}', space=vmem, size = 0x4000, scoped, tag = 'input window, operand 4, single buffered']
    #allocation10 [shape = 's32[1]{0}', space=sflag, size = 0x4, scoped, tag = 'scoped memory for attention_gru.1']
    #allocation11 [shape = 'u8[1024]{0}', space=vmem, size = 0x400, scoped, tag = 'output window, operand 0, single buffered']
    %11 = vsyncpa [#allocation4], 0
    %12 = vsyncpa [#allocation7], 0
    %13 = vsyncpa [#allocation10], 0
    %14 = vsyncpa [#allocation5], 0
    // Predicated region
    $region2: #{attention_gru.1} parent=1 // pred_check
      _
    $region3: #{attention_gru.1} parent=1 // pred_check_branch
      %16 = sbr.rel (0) target = $region5
    $region4: #{attention_gru.1} parent=1 // pred_region
      %18 = vsyncadd [#allocation4], 0
      %s19 = sshll.u32 %s0, 4
      %s20 = int_to_ptr.hbm [resolvable:$true] %s19
      %s21 = sshll.u32 [#allocation3], 4
      %s22 = int_to_ptr.vmem [resolvable:$true] %s21
      %27 = dma.hbm_to_vmem [thread:$0]  %s20, 256, %s22, [#allocation4], 128, 128, 8
    $region5: #{attention_gru.1} parent=1 // pred_fallthru
      _
    // Predicated region
    $region6: #{attention_gru.1} parent=1 // pred_check
      _
    $region7: #{attention_gru.1} parent=1 // pred_check_branch
      %29 = sbr.rel (0) target = $region9
    $region8: #{attention_gru.1} parent=1 // pred_region
      %31 = vsyncadd [#allocation7], 0
      %s33 = sshll.u32 %s1, 4
      %s34 = int_to_ptr.hbm [resolvable:$true] %s33
      %s35 = sshll.u32 [#allocation6], 4
      %s36 = int_to_ptr.vmem [resolvable:$true] %s35
      %38 = dma.hbm_to_vmem [thread:$0]  %s34, 32, %s36, [#allocation7]
    $region9: #{attention_gru.1} parent=1 // pred_fallthru
      _
    // Predicated region
    $region10: #{attention_gru.1} parent=1 // pred_check
      _
    $region11: #{attention_gru.1} parent=1 // pred_check_branch
      %40 = sbr.rel (0) target = $region13
    $region12: #{attention_gru.1} parent=1 // pred_region
      %42 = vsyncadd [#allocation7], 0
      %s43 = sshll.u32 %s2, 4
      %s44 = int_to_ptr.hbm [resolvable:$true] %s43
      %s45 = sshll.u32 [#allocation8], 4
      %s46 = int_to_ptr.vmem [resolvable:$true] %s45
      %51 = dma.hbm_to_vmem [thread:$0]  %s44, 512, %s46, [#allocation7], 128, 128, 8
    $region13: #{attention_gru.1} parent=1 // pred_fallthru
      _
    // Predicated region
    $region14: #{attention_gru.1} parent=1 // pred_check
      _
    $region15: #{attention_gru.1} parent=1 // pred_check_branch
      %53 = sbr.rel (0) target = $region17
    $region16: #{attention_gru.1} parent=1 // pred_region
      _
    $region17: #{attention_gru.1} parent=1 // pred_fallthru
      _
    // Predicated region
    $region18: #{attention_gru.1} parent=1 // pred_check
      _
    $region19: #{attention_gru.1} parent=1 // pred_check_branch
      %55 = sbr.rel (0) target = $region21
    $region20: #{attention_gru.1} parent=1 // pred_region
      %57 = vsyncadd [#allocation10], 0
      %s58 = sshll.u32 %s4, 4
      %s59 = int_to_ptr.hbm [resolvable:$true] %s58
      %s60 = sshll.u32 [#allocation9], 4
      %s61 = int_to_ptr.vmem [resolvable:$true] %s60
      %66 = dma.hbm_to_vmem [thread:$0]  %s59, 512, %s61, [#allocation10], 128, 128, 8
    $region21: #{attention_gru.1} parent=1 // pred_fallthru
      _
    // Predicated region
    $region22: #{attention_gru.1} parent=1 // pred_check
      _
    $region23: #{attention_gru.1} parent=1 // pred_check_branch
      %68 = sbr.rel (0) target = $region25
    $region24: #{attention_gru.1} parent=1 // pred_region
      _
    $region25: #{attention_gru.1} parent=1 // pred_fallthru
      _
    // Predicated region
    $region26: #{attention_gru.1} parent=1 // pred_check
      _
    $region27: #{attention_gru.1} parent=1 // pred_check_branch
      %70 = sbr.rel (0) target = $region29
    $region28: #{attention_gru.1} parent=1 // pred_region
      %72 = dma.done [#allocation4], 256
    $region29: #{attention_gru.1} parent=1 // pred_fallthru
      _
    // Predicated region
    $region30: #{attention_gru.1} parent=1 // pred_check
      _
    $region31: #{attention_gru.1} parent=1 // pred_check_branch
      %74 = sbr.rel (0) target = $region33
    $region32: #{attention_gru.1} parent=1 // pred_region
      %76 = dma.done [#allocation7], 32
    $region33: #{attention_gru.1} parent=1 // pred_fallthru
      _
    // Predicated region
    $region34: #{attention_gru.1} parent=1 // pred_check
      _
    $region35: #{attention_gru.1} parent=1 // pred_check_branch
      %78 = sbr.rel (0) target = $region37
    $region36: #{attention_gru.1} parent=1 // pred_region
      %80 = dma.done [#allocation7], 512
    $region37: #{attention_gru.1} parent=1 // pred_fallthru
      _
    // Predicated region
    $region38: #{attention_gru.1} parent=1 // pred_check
      _
    $region39: #{attention_gru.1} parent=1 // pred_check_branch
      %82 = sbr.rel (0) target = $region41
    $region40: #{attention_gru.1} parent=1 // pred_region
      %84 = dma.done [#allocation10], 512
    $region41: #{attention_gru.1} parent=1 // pred_fallthru
      _
    %v85 = vld [vmem:[#allocation3] sm:$0xff]
    %v86 = vld [vmem:[#allocation3 + $0x8] sm:$0xff]
    %v87 = vld [vmem:[#allocation8] sm:$0xff]
    %v88 = vld [vmem:[#allocation8 + $0x8] sm:$0xff]
    %v89 = vld [vmem:[#allocation8 + $0x10] sm:$0xff]
    %v90 = vld [vmem:[#allocation8 + $0x18] sm:$0xff]
    %v91 = vld [vmem:[%s3] sm:$0x1]
    %v93 = vperm.slane %v91, 0
    %vm95 = vcmask 261120
    %v97 = vsel %vm95, %v85, 0
    %v100 = vsel %vm95, %v86, 0
    %102 = vmatpush.msra.mxu0 0.0
    %103 = vmatpush.msra.mxu0 0.0
    %104 = vmatpush.msra.mxu0 0.0
    %105 = vmatpush.msra.mxu0 0.0
    %106 = vmatpush.msra.mxu0 0.0
    %107 = vmatpush.msra.mxu0 0.0
    %108 = vmatpush.msra.mxu0 0.0
    %109 = vmatpush.msra.mxu0 0.0
    %110 = vmatpush.msra.mxu0 0.0
    %111 = vmatpush.msra.mxu0 0.0
    %112 = vmatpush.msra.mxu0 0.0
    %113 = vmatpush.msra.mxu0 0.0
    %114 = vmatpush.msra.mxu0 %v90
    %115 = vmatpush.msra.mxu0 %v89
    %116 = vmatpush.msra.mxu0 %v88
    %117 = vmatpush.msra.mxu0 %v87
    %118 = vmatmul.f32.gmra.mxu0 %v97
    %v119 = vpop.f32.mrf.mxu0
    %v120 = vadd.f32 %v93, %v119
    %121 = vmatmul.f32.gmra.mxu0 %v100
    %v122 = vpop.f32.mrf.mxu0
    %v123 = vadd.f32 %v93, %v122
    %124 = vdwg.mxu0
    %vm125 = vcmask 523264
    %126 = vst.msk [vmem:[#allocation2] sm:$0xff] %vm125, %v120
    %127 = vst.msk [vmem:[#allocation2 + $0x8] sm:$0xff] %vm125, %v123
    %v128 = vld [vmem:[#allocation6] sm:$0x3]
    %v129 = vld [vmem:[#allocation9] sm:$0xff]
    %v130 = vld [vmem:[#allocation9 + $0x8] sm:$0xff]
    %v131 = vld [vmem:[#allocation9 + $0x10] sm:$0xff]
    %v132 = vld [vmem:[#allocation9 + $0x18] sm:$0xff]
    %v133 = vld [vmem:[%s5] sm:$0x1]
    %v134 = vld [vmem:[#allocation2] ss:$8 sm:$0x3]
    %v136 = vsel %vm95, 0.0, 0
    %138 = vmatpush.msra.mxu0 0.0
    %139 = vmatpush.msra.mxu0 0.0
    %140 = vmatpush.msra.mxu0 0.0
    %141 = vmatpush.msra.mxu0 0.0
    %142 = vmatpush.msra.mxu0 0.0
    %143 = vmatpush.msra.mxu0 0.0
    %144 = vmatpush.msra.mxu0 0.0
    %145 = vmatpush.msra.mxu0 0.0
    %146 = vmatpush.msra.mxu0 0.0
    %147 = vmatpush.msra.mxu0 0.0
    %148 = vmatpush.msra.mxu0 0.0
    %149 = vmatpush.msra.mxu0 0.0
    %150 = vmatpush.msra.mxu0 %v132
    %151 = vmatpush.msra.mxu0 %v131
    %152 = vmatpush.msra.mxu0 %v130
    %153 = vmatpush.msra.mxu0 %v129
    %154 = vmatmul.f32.gmra.mxu0 %v136
    %v155 = vpop.f32.mrf.mxu0
    %v156 = vadd.f32 0.0, %v155
    %157 = vdwg.mxu0
    %v158 = vadd.f32 %v134, %v156
    %v159 = vmul.f32 %v158, 0.5
    %v160 = vtanh.pop %v159
    %v161 = vmul.f32 %v160, 0.5
    %v162 = vadd.f32 %v161, 0.5
    %v164 = vperm.slane %v133, 0
    %165 = vrot.lane.b32.xlu0 %v164, 32
    %v166 = vpop.permute.xlu0 %165
    %v168 = vadd.f32 %v156, %v166
    %170 = vrot.lane.b32.xlu0 %v168, 96
    %v171 = vpop.permute.xlu0 %170
    %v173 = vmul.f32 %v162, %v171
    %175 = vrot.lane.b32.xlu0 %v173, 32
    %v176 = vpop.permute.xlu0 %175
    %v178 = vadd.f32 %v134, %v176
    %v179 = vtanh.pop %v178
    %181 = vset.pattern.permute.xlu0 0
    %182 = vperm.xlu0 %181, %v128
    %v183 = vpop.permute.xlu0 %182
    %v185 = vmul.f32 %v183, %v179
    %v186 = vadd.f32 %v185, 0.0
    %s187 = scalar_lea.vmem [#allocation2], 1
    %v188 = vld [vmem:[%s187] ss:$8 sm:$0x3]
    %190 = vrot.lane.b32.xlu0 %v186, 96
    %v191 = vpop.permute.xlu0 %190
    %v192 = vsel %vm95, %v191, 0
    %194 = vmatpush.msra.mxu0 0.0
    %195 = vmatpush.msra.mxu0 0.0
    %196 = vmatpush.msra.mxu0 0.0
    %197 = vmatpush.msra.mxu0 0.0
    %198 = vmatpush.msra.mxu0 0.0
    %199 = vmatpush.msra.mxu0 0.0
    %200 = vmatpush.msra.mxu0 0.0
    %201 = vmatpush.msra.mxu0 0.0
    %202 = vmatpush.msra.mxu0 0.0
    %203 = vmatpush.msra.mxu0 0.0
    %204 = vmatpush.msra.mxu0 0.0
    %205 = vmatpush.msra.mxu0 0.0
    %206 = vmatpush.msra.mxu0 %v132
    %207 = vmatpush.msra.mxu0 %v131
    %208 = vmatpush.msra.mxu0 %v130
    %209 = vmatpush.msra.mxu0 %v129
    %210 = vmatmul.f32.gmra.mxu0 %v192
    %v211 = vpop.f32.mrf.mxu0
    %v212 = vadd.f32 0.0, %v211
    %213 = vdwg.mxu0
    %v214 = vadd.f32 %v188, %v212
    %v215 = vmul.f32 %v214, 0.5
    %v216 = vtanh.pop %v215
    %v217 = vmul.f32 %v216, 0.5
    %v218 = vadd.f32 %v217, 0.5
    %v219 = vadd.f32 %v212, %v166
    %221 = vrot.lane.b32.xlu0 %v219, 96
    %v222 = vpop.permute.xlu0 %221
    %v224 = vmul.f32 %v218, %v222
    %226 = vrot.lane.b32.xlu0 %v224, 32
    %v227 = vpop.permute.xlu0 %226
    %v229 = vadd.f32 %v188, %v227
    %v230 = vtanh.pop %v229
    %v231 = vsub.f32 %v230, %v186
    %232 = vset.pattern.permute.xlu0 1
    %233 = vperm.xlu0 %232, %v128
    %v234 = vpop.permute.xlu0 %233
    %v236 = vmul.f32 %v234, %v231
    %v237 = vadd.f32 %v186, %v236
    %s238 = scalar_lea.vmem [#allocation2], 2
    %v239 = vld [vmem:[%s238] ss:$8 sm:$0x3]
    %241 = vrot.lane.b32.xlu0 %v237, 96
    %v242 = vpop.permute.xlu0 %241
    %v243 = vsel %vm95, %v242, 0
    %245 = vmatpush.msra.mxu0 0.0
    %246 = vmatpush.msra.mxu0 0.0
    %247 = vmatpush.msra.mxu0 0.0
    %248 = vmatpush.msra.mxu0 0.0
    %249 = vmatpush.msra.mxu0 0.0
    %250 = vmatpush.msra.mxu0 0.0
    %251 = vmatpush.msra.mxu0 0.0
    %252 = vmatpush.msra.mxu0 0.0
    %253 = vmatpush.msra.mxu0 0.0
    %254 = vmatpush.msra.mxu0 0.0
    %255 = vmatpush.msra.mxu0 0.0
    %256 = vmatpush.msra.mxu0 0.0
    %257 = vmatpush.msra.mxu0 %v132
    %258 = vmatpush.msra.mxu0 %v131
    %259 = vmatpush.msra.mxu0 %v130
    %260 = vmatpush.msra.mxu0 %v129
    %261 = vmatmul.f32.gmra.mxu0 %v243
    %v262 = vpop.f32.mrf.mxu0
    %v263 = vadd.f32 0.0, %v262
    %264 = vdwg.mxu0
    %v265 = vadd.f32 %v239, %v263
    %v266 = vmul.f32 %v265, 0.5
    %v267 = vtanh.pop %v266
    %v268 = vmul.f32 %v267, 0.5
    %v269 = vadd.f32 %v268, 0.5
    %v270 = vadd.f32 %v263, %v166
    %272 = vrot.lane.b32.xlu0 %v270, 96
    %v273 = vpop.permute.xlu0 %272
    %v275 = vmul.f32 %v269, %v273
    %277 = vrot.lane.b32.xlu0 %v275, 32
    %v278 = vpop.permute.xlu0 %277
    %v280 = vadd.f32 %v239, %v278
    %v281 = vtanh.pop %v280
    %v282 = vsub.f32 %v281, %v237
    %283 = vset.pattern.permute.xlu0 2
    %284 = vperm.xlu0 %283, %v128
    %v285 = vpop.permute.xlu0 %284
    %v287 = vmul.f32 %v285, %v282
    %v288 = vadd.f32 %v237, %v287
    %s289 = scalar_lea.vmem [#allocation2], 3
    %v290 = vld [vmem:[%s289] ss:$8 sm:$0x3]
    %292 = vrot.lane.b32.xlu0 %v288, 96
    %v293 = vpop.permute.xlu0 %292
    %v294 = vsel %vm95, %v293, 0
    %296 = vmatpush.msra.mxu0 0.0
    %297 = vmatpush.msra.mxu0 0.0
    %298 = vmatpush.msra.mxu0 0.0
    %299 = vmatpush.msra.mxu0 0.0
    %300 = vmatpush.msra.mxu0 0.0
    %301 = vmatpush.msra.mxu0 0.0
    %302 = vmatpush.msra.mxu0 0.0
    %303 = vmatpush.msra.mxu0 0.0
    %304 = vmatpush.msra.mxu0 0.0
    %305 = vmatpush.msra.mxu0 0.0
    %306 = vmatpush.msra.mxu0 0.0
    %307 = vmatpush.msra.mxu0 0.0
    %308 = vmatpush.msra.mxu0 %v132
    %309 = vmatpush.msra.mxu0 %v131
    %310 = vmatpush.msra.mxu0 %v130
    %311 = vmatpush.msra.mxu0 %v129
    %312 = vmatmul.f32.gmra.mxu0 %v294
    %v313 = vpop.f32.mrf.mxu0
    %v314 = vadd.f32 0.0, %v313
    %315 = vdwg.mxu0
    %v316 = vadd.f32 %v290, %v314
    %v317 = vmul.f32 %v316, 0.5
    %v318 = vtanh.pop %v317
    %v319 = vmul.f32 %v318, 0.5
    %v320 = vadd.f32 %v319, 0.5
    %v321 = vadd.f32 %v314, %v166
    %323 = vrot.lane.b32.xlu0 %v321, 96
    %v324 = vpop.permute.xlu0 %323
    %v326 = vmul.f32 %v320, %v324
    %328 = vrot.lane.b32.xlu0 %v326, 32
    %v329 = vpop.permute.xlu0 %328
    %v331 = vadd.f32 %v290, %v329
    %v332 = vtanh.pop %v331
    %v333 = vsub.f32 %v332, %v288
    %334 = vset.pattern.permute.xlu0 3
    %335 = vperm.xlu0 %334, %v128
    %v336 = vpop.permute.xlu0 %335
    %v338 = vmul.f32 %v336, %v333
    %v339 = vadd.f32 %v288, %v338
    %s340 = scalar_lea.vmem [#allocation2], 4
    %v341 = vld [vmem:[%s340] ss:$8 sm:$0x3]
    %343 = vrot.lane.b32.xlu0 %v339, 96
    %v344 = vpop.permute.xlu0 %343
    %v345 = vsel %vm95, %v344, 0
    %347 = vmatpush.msra.mxu0 0.0
    %348 = vmatpush.msra.mxu0 0.0
    %349 = vmatpush.msra.mxu0 0.0
    %350 = vmatpush.msra.mxu0 0.0
    %351 = vmatpush.msra.mxu0 0.0
    %352 = vmatpush.msra.mxu0 0.0
    %353 = vmatpush.msra.mxu0 0.0
    %354 = vmatpush.msra.mxu0 0.0
    %355 = vmatpush.msra.mxu0 0.0
    %356 = vmatpush.msra.mxu0 0.0
    %357 = vmatpush.msra.mxu0 0.0
    %358 = vmatpush.msra.mxu0 0.0
    %359 = vmatpush.msra.mxu0 %v132
    %360 = vmatpush.msra.mxu0 %v131
    %361 = vmatpush.msra.mxu0 %v130
    %362 = vmatpush.msra.mxu0 %v129
    %363 = vmatmul.f32.gmra.mxu0 %v345
    %v364 = vpop.f32.mrf.mxu0
    %v365 = vadd.f32 0.0, %v364
    %366 = vdwg.mxu0
    %v367 = vadd.f32 %v341, %v365
    %v368 = vmul.f32 %v367, 0.5
    %v369 = vtanh.pop %v368
    %v370 = vmul.f32 %v369, 0.5
    %v371 = vadd.f32 %v370, 0.5
    %v372 = vadd.f32 %v365, %v166
    %374 = vrot.lane.b32.xlu0 %v372, 96
    %v375 = vpop.permute.xlu0 %374
    %v377 = vmul.f32 %v371, %v375
    %379 = vrot.lane.b32.xlu0 %v377, 32
    %v380 = vpop.permute.xlu0 %379
    %v382 = vadd.f32 %v341, %v380
    %v383 = vtanh.pop %v382
    %v384 = vsub.f32 %v383, %v339
    %385 = vset.pattern.permute.xlu0 4
    %386 = vperm.xlu0 %385, %v128
    %v387 = vpop.permute.xlu0 %386
    %v389 = vmul.f32 %v387, %v384
    %v390 = vadd.f32 %v339, %v389
    %s391 = scalar_lea.vmem [#allocation2], 5
    %v392 = vld [vmem:[%s391] ss:$8 sm:$0x3]
    %394 = vrot.lane.b32.xlu0 %v390, 96
    %v395 = vpop.permute.xlu0 %394
    %v396 = vsel %vm95, %v395, 0
    %398 = vmatpush.msra.mxu0 0.0
    %399 = vmatpush.msra.mxu0 0.0
    %400 = vmatpush.msra.mxu0 0.0
    %401 = vmatpush.msra.mxu0 0.0
    %402 = vmatpush.msra.mxu0 0.0
    %403 = vmatpush.msra.mxu0 0.0
    %404 = vmatpush.msra.mxu0 0.0
    %405 = vmatpush.msra.mxu0 0.0
    %406 = vmatpush.msra.mxu0 0.0
    %407 = vmatpush.msra.mxu0 0.0
    %408 = vmatpush.msra.mxu0 0.0
    %409 = vmatpush.msra.mxu0 0.0
    %410 = vmatpush.msra.mxu0 %v132
    %411 = vmatpush.msra.mxu0 %v131
    %412 = vmatpush.msra.mxu0 %v130
    %413 = vmatpush.msra.mxu0 %v129
    %414 = vmatmul.f32.gmra.mxu0 %v396
    %v415 = vpop.f32.mrf.mxu0
    %v416 = vadd.f32 0.0, %v415
    %417 = vdwg.mxu0
    %v418 = vadd.f32 %v392, %v416
    %v419 = vmul.f32 %v418, 0.5
    %v420 = vtanh.pop %v419
    %v421 = vmul.f32 %v420, 0.5
    %v422 = vadd.f32 %v421, 0.5
    %v423 = vadd.f32 %v416, %v166
    %425 = vrot.lane.b32.xlu0 %v423, 96
    %v426 = vpop.permute.xlu0 %425
    %v428 = vmul.f32 %v422, %v426
    %430 = vrot.lane.b32.xlu0 %v428, 32
    %v431 = vpop.permute.xlu0 %430
    %v433 = vadd.f32 %v392, %v431
    %v434 = vtanh.pop %v433
    %v435 = vsub.f32 %v434, %v390
    %436 = vset.pattern.permute.xlu0 5
    %437 = vperm.xlu0 %436, %v128
    %v438 = vpop.permute.xlu0 %437
    %v440 = vmul.f32 %v438, %v435
    %v441 = vadd.f32 %v390, %v440
    %s442 = scalar_lea.vmem [#allocation2], 6
    %v443 = vld [vmem:[%s442] ss:$8 sm:$0x3]
    %445 = vrot.lane.b32.xlu0 %v441, 96
    %v446 = vpop.permute.xlu0 %445
    %v447 = vsel %vm95, %v446, 0
    %449 = vmatpush.msra.mxu0 0.0
    %450 = vmatpush.msra.mxu0 0.0
    %451 = vmatpush.msra.mxu0 0.0
    %452 = vmatpush.msra.mxu0 0.0
    %453 = vmatpush.msra.mxu0 0.0
    %454 = vmatpush.msra.mxu0 0.0
    %455 = vmatpush.msra.mxu0 0.0
    %456 = vmatpush.msra.mxu0 0.0
    %457 = vmatpush.msra.mxu0 0.0
    %458 = vmatpush.msra.mxu0 0.0
    %459 = vmatpush.msra.mxu0 0.0
    %460 = vmatpush.msra.mxu0 0.0
    %461 = vmatpush.msra.mxu0 %v132
    %462 = vmatpush.msra.mxu0 %v131
    %463 = vmatpush.msra.mxu0 %v130
    %464 = vmatpush.msra.mxu0 %v129
    %465 = vmatmul.f32.gmra.mxu0 %v447
    %v466 = vpop.f32.mrf.mxu0
    %v467 = vadd.f32 0.0, %v466
    %468 = vdwg.mxu0
    %v469 = vadd.f32 %v443, %v467
    %v470 = vmul.f32 %v469, 0.5
    %v471 = vtanh.pop %v470
    %v472 = vmul.f32 %v471, 0.5
    %v473 = vadd.f32 %v472, 0.5
    %v474 = vadd.f32 %v467, %v166
    %476 = vrot.lane.b32.xlu0 %v474, 96
    %v477 = vpop.permute.xlu0 %476
    %v479 = vmul.f32 %v473, %v477
    %481 = vrot.lane.b32.xlu0 %v479, 32
    %v482 = vpop.permute.xlu0 %481
    %v484 = vadd.f32 %v443, %v482
    %v485 = vtanh.pop %v484
    %v486 = vsub.f32 %v485, %v441
    %487 = vset.pattern.permute.xlu0 6
    %488 = vperm.xlu0 %487, %v128
    %v489 = vpop.permute.xlu0 %488
    %v491 = vmul.f32 %v489, %v486
    %v492 = vadd.f32 %v441, %v491
    %s493 = scalar_lea.vmem [#allocation2], 7
    %v494 = vld [vmem:[%s493] ss:$8 sm:$0x3]
    %496 = vrot.lane.b32.xlu0 %v492, 96
    %v497 = vpop.permute.xlu0 %496
    %v498 = vsel %vm95, %v497, 0
    %500 = vmatpush.msra.mxu0 0.0
    %501 = vmatpush.msra.mxu0 0.0
    %502 = vmatpush.msra.mxu0 0.0
    %503 = vmatpush.msra.mxu0 0.0
    %504 = vmatpush.msra.mxu0 0.0
    %505 = vmatpush.msra.mxu0 0.0
    %506 = vmatpush.msra.mxu0 0.0
    %507 = vmatpush.msra.mxu0 0.0
    %508 = vmatpush.msra.mxu0 0.0
    %509 = vmatpush.msra.mxu0 0.0
    %510 = vmatpush.msra.mxu0 0.0
    %511 = vmatpush.msra.mxu0 0.0
    %512 = vmatpush.msra.mxu0 %v132
    %513 = vmatpush.msra.mxu0 %v131
    %514 = vmatpush.msra.mxu0 %v130
    %515 = vmatpush.msra.mxu0 %v129
    %516 = vmatmul.f32.gmra.mxu0 %v498
    %v517 = vpop.f32.mrf.mxu0
    %v518 = vadd.f32 0.0, %v517
    %519 = vdwg.mxu0
    %v520 = vadd.f32 %v494, %v518
    %v521 = vmul.f32 %v520, 0.5
    %v522 = vtanh.pop %v521
    %v523 = vmul.f32 %v522, 0.5
    %v524 = vadd.f32 %v523, 0.5
    %v525 = vadd.f32 %v518, %v166
    %527 = vrot.lane.b32.xlu0 %v525, 96
    %v528 = vpop.permute.xlu0 %527
    %v530 = vmul.f32 %v524, %v528
    %532 = vrot.lane.b32.xlu0 %v530, 32
    %v533 = vpop.permute.xlu0 %532
    %v535 = vadd.f32 %v494, %v533
    %v536 = vtanh.pop %v535
    %v537 = vsub.f32 %v536, %v492
    %538 = vset.pattern.permute.xlu0 7
    %539 = vperm.xlu0 %538, %v128
    %v540 = vpop.permute.xlu0 %539
    %v542 = vmul.f32 %v540, %v537
    %v543 = vadd.f32 %v492, %v542
    %545 = vrot.lane.b32.xlu0 %v543, 96
    %v546 = vpop.permute.xlu0 %545
    %vm548 = vcmask 254976
    %549 = vst.msk [vmem:[#allocation11] sm:$0x3] %vm548, %v546
    // Predicated region
    $region42: #{attention_gru.1} parent=1 // pred_check
      _
    $region43: #{attention_gru.1} parent=1 // pred_check_branch
      %551 = sbr.rel (0) target = $region45
    $region44: #{attention_gru.1} parent=1 // pred_region
      %553 = vsyncadd [#allocation5], 0
      %s555 = sshll.u32 [#allocation11], 4
      %s556 = int_to_ptr.vmem [resolvable:$true] %s555
      %s557 = sshll.u32 %s6, 4
      %s558 = int_to_ptr.hbm [resolvable:$true] %s557
      %560 = dma.vmem_to_hbm [thread:$0]  %s556, 32, %s558, [#allocation5]
    $region45: #{attention_gru.1} parent=1 // pred_fallthru
      _
    // Predicated region
    $region46: #{attention_gru.1} parent=1 // pred_check
      _
    $region47: #{attention_gru.1} parent=1 // pred_check_branch
      %562 = sbr.rel (0) target = $region49
    $region48: #{attention_gru.1} parent=1 // pred_region
      %564 = dma.done [#allocation5], 32
    $region49: #{attention_gru.1} parent=1 // pred_fallthru
      _
    %565 = vsyncpa [#allocation4], 1
    %566 = vsyncpa [#allocation7], 1
    %567 = vsyncpa [#allocation10], 1
    %568 = vsyncpa [#allocation5], 1

</llo_original>
